<compile_context>
chip_gen: v7x
topology: tpu7x:2x2x1
jax: 0.10.0
libtpu: 0.0.40
codegen_flags: <defaults>
</compile_context>

<pallas_src>
import functools

import jax
import jax.numpy as jnp
import numpy as np
from jax import lax
from jax.experimental import pallas as pl
from jax.experimental.pallas import tpu as pltpu


def _conv_bn_relu_kernel(x_ref, w_ref, shift_ref, o_ref, *,
                         taps, sub_rows, n_sub, ow, ktap, apply_relu,
                         spatial_flat):
    # x_ref:     (1, H_in*W_in, C_in) if spatial_flat else (1, H_in, W_in, C_in)
    # w_ref:     (n_w, ktap, o_pad)   BN-scale-folded weights (bf16)
    # shift_ref: (1, o_pad)           folded BN shift (+ conv bias), f32
    # o_ref:     (1, toh*ow, o_pad)   flat output slab, lane-dense last dim
    m_sub = sub_rows * ow
    o_pad = o_ref.shape[-1]
    row_base = pl.program_id(1) * (sub_rows * n_sub)   # first output row of tile
    shift = shift_ref[...]                             # hoisted, loaded once

    for it in range(n_sub):      # static; each iteration ends with its store
        row_start = row_base + it * sub_rows
        acc = None
        for ro, co, cs, wi in taps:
            if spatial_flat:
                start = (row_start + ro) * ow
                if ow % 8 == 0:
                    start = pl.multiple_of(start, 8)
                patch = x_ref[0, pl.ds(start, m_sub), :]          # (m_sub, ktap)
            else:
                patch = x_ref[0, pl.ds(row_start + ro, sub_rows),
                              co:co + ow, cs:cs + ktap]
                patch = patch.reshape(m_sub, ktap)
            d = jnp.dot(patch, w_ref[wi], preferred_element_type=jnp.float32)
            acc = d if acc is None else acc + d
        # fused epilogue: shift + ReLU + cast + store per sub-tile
        y = acc + shift
        if apply_relu:
            y = jnp.maximum(y, 0.0)
        o_ref[0, pl.ds(it * m_sub, m_sub), :] = y.astype(o_ref.dtype)


def basic_conv2d(x, weight, bias=None, bn_params=None, *, stride=1, padding=0,
                 relu=False, bn=False, eps=1e-5,
                 compute_dtype=jnp.bfloat16, out_dtype=jnp.float32,
                 in_layout="NCHW", out_layout="NCHW"):
    """Pallas implementation of BasicConv2D.forward (eval-mode BN).

    x:      (B, C, H, W) float32 (or NHWC if in_layout="NHWC")
    weight: (O, C, KH, KW)
    bias:   (O,) or None
    bn_params: (gamma, beta, running_mean, running_var) each (O,) or None
    returns (B, O, OH, OW) (or NHWC if out_layout="NHWC"), dtype out_dtype
    """
    if in_layout == "NCHW":
        x = jnp.transpose(x, (0, 2, 3, 1))
    b, h, w, c = x.shape
    o, c_w, kh, kw = weight.shape
    assert c_w == c, (c_w, c)
    s = int(stride)

    oh = (h + 2 * padding - kh) // s + 1
    ow = (w + 2 * padding - kw) // s + 1
    assert oh > 0 and ow > 0

    # ---- fold eval-mode BN (+ conv bias) into per-channel scale / shift ----
    if bn:
        gamma, beta, rmean, rvar = bn_params
        scale = gamma / jnp.sqrt(rvar + eps)
        shift = beta - rmean * scale
        if bias is not None:
            shift = shift + bias * scale
    else:
        scale = jnp.ones((o,), jnp.float32)
        shift = (bias.astype(jnp.float32) if bias is not None
                 else jnp.zeros((o,), jnp.float32))

    o_pad = pl.cdiv(o, 128) * 128          # lane-dense output channels

    # ---- sub-tile sizing: ~128-256 output pixels, sublane(8)-aligned ----
    m_target = max(8, min(256, 32768 // o_pad))
    sub_rows = min(oh, max(1, pl.cdiv(m_target, ow)))
    r = sub_rows
    while r <= min(oh, sub_rows + 8):      # gcd(ow,8) periodicity => <=8 tries
        if (r * ow) % 8 == 0:
            sub_rows = r
            break
        r += 1
    n_sub = max(1, min(pl.cdiv(oh, sub_rows), 8,
                       max(1, 2048 // (sub_rows * ow))))
    toh = sub_rows * n_sub
    n_row_tiles = pl.cdiv(oh, toh)
    if n_row_tiles > 1 and (toh * ow) % 8 != 0:
        # keep the output block either sublane-aligned or full-extent
        n_sub = pl.cdiv(oh, sub_rows)
        toh = sub_rows * n_sub
        n_row_tiles = 1
    oh_p = n_row_tiles * toh

    w_r = jnp.transpose(weight, (2, 3, 1, 0)).astype(jnp.float32)  # (kh,kw,c,o)

    # ---- layout / tap plan (all in-kernel slices are contiguous) ----
    unfold_kw = (s == 1 and kw * c <= 128)
    if s == 1:
        h_in = oh_p + kh - 1                       # rows the last sub-tile needs
        pad_b = h_in - (h + padding)               # >= padding >= 0
        x_p = jnp.pad(x, ((0, 0), (padding, pad_b), (padding, padding), (0, 0)))
        if unfold_kw:
            # fold the kw taps into channels: K = kw*c, kh dots, flat addressing
            x_in = jnp.concatenate(
                [x_p[:, :, j:j + ow, :] for j in range(kw)], axis=-1)
            w_mats = w_r.reshape(kh, kw * c, o)
            taps = tuple((i, 0, 0, i) for i in range(kh))
            ktap = kw * c
        else:
            x_in = x_p
            w_mats = w_r.reshape(kh * kw, c, o)
            taps = tuple((i, j, 0, i * kw + j)
                         for i in range(kh) for j in range(kw))
            ktap = c
        spatial_flat = unfold_kw or kw == 1
    else:
        # space-to-depth: stride phases folded into channels -> contiguous slices
        hp_need = (oh_p - 1) * s + kh
        wp_need = (ow - 1) * s + kw
        hp_c = pl.cdiv(max(h + 2 * padding, hp_need), s) * s
        wp_c = pl.cdiv(max(w + 2 * padding, wp_need), s) * s
        x_p = jnp.pad(x, ((0, 0),
                          (padding, hp_c - h - padding),
                          (padding, wp_c - w - padding),
                          (0, 0)))
        x_in = x_p.reshape(b, hp_c // s, s, wp_c // s, s, c)
        x_in = jnp.transpose(x_in, (0, 1, 3, 2, 4, 5))
        x_in = x_in.reshape(b, hp_c // s, wp_c // s, s * s * c)
        w_mats = w_r.reshape(kh * kw, c, o)
        taps = tuple((i // s, j // s, ((i % s) * s + (j % s)) * c, i * kw + j)
                     for i in range(kh) for j in range(kw))
        ktap = c
        spatial_flat = False

    if spatial_flat:
        x_in = x_in.reshape(b, x_in.shape[1] * x_in.shape[2], x_in.shape[3])

    # fold BN scale into weight columns; pad O to lane-dense o_pad; cast bf16
    w_mats = w_mats * scale.reshape(1, 1, o)
    w_mats = jnp.pad(w_mats, ((0, 0), (0, 0), (0, o_pad - o))).astype(compute_dtype)
    shift_p = jnp.pad(shift.astype(jnp.float32), (0, o_pad - o)).reshape(1, o_pad)
    x_in = x_in.astype(compute_dtype)

    n_w = w_mats.shape[0]
    if spatial_flat:
        x_spec = pl.BlockSpec((1, x_in.shape[1], x_in.shape[2]),
                              lambda bi, ri: (bi, 0, 0))
    else:
        x_spec = pl.BlockSpec((1, x_in.shape[1], x_in.shape[2], x_in.shape[3]),
                              lambda bi, ri: (bi, 0, 0, 0))
    # weight / shift blocks are grid-invariant (DMA'd once per image); for very
    # large layers, pl.Buffered(1) here would drop the second pipeline buffer.
    w_spec = pl.BlockSpec((n_w, ktap, o_pad), lambda bi, ri: (0, 0, 0))
    s_spec = pl.BlockSpec((1, o_pad), lambda bi, ri: (0, 0))
    o_spec = pl.BlockSpec((1, toh * ow, o_pad), lambda bi, ri: (bi, ri, 0))

    try:
        vmem_limit = int(pltpu.get_tpu_info().vmem_capacity_bytes * 0.85)
    except Exception:  # pragma: no cover - fallback for older runtimes
        vmem_limit = 48 * 1024 * 1024
    vmem_limit = max(vmem_limit, 32 * 1024 * 1024)

    # batch sharded across TCs when B > 1 (avoids duplicating the image DMA);
    # with B == 1 let megacore split the row tiles instead.
    dims = ("parallel", "arbitrary") if b > 1 else ("arbitrary", "parallel")

    kernel = functools.partial(
        _conv_bn_relu_kernel, taps=taps, sub_rows=sub_rows, n_sub=n_sub,
        ow=ow, ktap=ktap, apply_relu=relu, spatial_flat=spatial_flat)

    out = pl.pallas_call(
        kernel,
        out_shape=jax.ShapeDtypeStruct((b, oh_p * ow, o_pad), out_dtype),
        grid=(b, n_row_tiles),
        in_specs=[x_spec, w_spec, s_spec],
        out_specs=o_spec,
        compiler_params=pltpu.CompilerParams(
            dimension_semantics=dims,
            vmem_limit_bytes=vmem_limit),
    )(x_in, w_mats, shift_p)

    # single fused strip (row / channel padding) + layout pass
    out = out.reshape(b, oh_p, ow, o_pad)[:, :oh, :, :o]
    if out_layout == "NHWC":
        return out
    return jnp.transpose(out, (0, 3, 1, 2))


def _reference(x, weight, bias, bn_params, *, stride, padding, relu, bn, eps=1e-5):
    y = lax.conv_general_dilated(
        x, weight, window_strides=(stride, stride),
        padding=[(padding, padding), (padding, padding)],
        dimension_numbers=("NCHW", "OIHW", "NCHW"))
    if bias is not None:
        y = y + bias.reshape(1, -1, 1, 1)
    if bn:
        gamma, beta, rmean, rvar = bn_params
        y = (y - rmean.reshape(1, -1, 1, 1)) / jnp.sqrt(rvar.reshape(1, -1, 1, 1) + eps)
        y = y * gamma.reshape(1, -1, 1, 1) + beta.reshape(1, -1, 1, 1)
    if relu:
        y = jnp.maximum(y, 0.0)
    return y


if __name__ == "__main__":
    key = jax.random.PRNGKey(0)
    kx, kw_, kg, kb, km, kv, kb2 = jax.random.split(key, 7)

    # --- Test 1: BasicConv2D(4, 8, 3, stride=1, padding=1, relu=True, bn=True,
    #             bias=False) -- exercises the kw-unfolded flat stride-1 path ---
    B, C, H, W = 2, 4, 16, 16
    O, KH, KW = 8, 3, 3
    x = jax.random.normal(kx, (B, C, H, W), jnp.float32)
    weight = jax.random.normal(kw_, (O, C, KH, KW), jnp.float32) * 0.1
    gamma = 1.0 + 0.1 * jax.random.normal(kg, (O,), jnp.float32)
    beta = 0.1 * jax.random.normal(kb, (O,), jnp.float32)
    running_mean = 0.05 * jax.random.normal(km, (O,), jnp.float32)
    running_var = jnp.abs(jax.random.normal(kv, (O,), jnp.float32)) + 0.5
    bn_params = (gamma, beta, running_mean, running_var)

    out1 = basic_conv2d(x, weight, None, bn_params, stride=1, padding=1,
                        relu=True, bn=True)
    out1 = jax.block_until_ready(out1)
    ref1 = jax.block_until_ready(
        _reference(x, weight, None, bn_params, stride=1, padding=1,
                   relu=True, bn=True))
    assert out1.shape == (B, O, H, W), out1.shape
    # Tolerance accounts for the deliberate bf16 matmul operands (f32 accumulate).
    np.testing.assert_allclose(np.asarray(out1), np.asarray(ref1),
                               rtol=3e-2, atol=3e-2)

    # --- Test 2: BasicConv2D(4, 8, 3, stride=2, padding=1, relu=True, bn=False,
    #             bias=True) -- exercises the space-to-depth strided path ---
    bias2 = 0.1 * jax.random.normal(kb2, (O,), jnp.float32)
    out2 = basic_conv2d(x, weight, bias2, None, stride=2, padding=1,
                        relu=True, bn=False)
    out2 = jax.block_until_ready(out2)
    ref2 = jax.block_until_ready(
        _reference(x, weight, bias2, None, stride=2, padding=1,
                   relu=True, bn=False))
    assert out2.shape == (B, O, 8, 8), out2.shape
    np.testing.assert_allclose(np.asarray(out2), np.asarray(ref2),
                               rtol=3e-2, atol=3e-2)

    print("KERNEL_OK")
</pallas_src>

<mosaic_0001>
module attributes {stable_mosaic.version = 11 : i64} {
  func.func @_conv_bn_relu_kernel(%arg0: i32, %arg1: i32, %arg2: memref<1x288x12xbf16, #tpu.memory_space<vmem>>, %arg3: memref<3x12x128xbf16, #tpu.memory_space<vmem>>, %arg4: memref<1x128xf32, #tpu.memory_space<vmem>>, %arg5: memref<1x256x128xf32, #tpu.memory_space<vmem>>) attributes {dimension_semantics = [#tpu.dimension_semantics<parallel>, #tpu.dimension_semantics<arbitrary>], iteration_bounds = array<i64: 2, 1>, scalar_prefetch = 0 : i64, scratch_operands = 0 : i64, tpu.core_type = #tpu.core_type<tc>, window_params = [{transform_indices = @transform_0, window_bounds = array<i64: 1, 288, 12>}, {pipeline_mode = #tpu.pipeline_mode<synchronous>, transform_indices = @transform_1, window_bounds = array<i64: 3, 12, 128>}, {pipeline_mode = #tpu.pipeline_mode<synchronous>, transform_indices = @transform_2, window_bounds = array<i64: 1, 128>}, {transform_indices = @transform_3, window_bounds = array<i64: 1, 256, 128>}]} {
    %c16_i32 = arith.constant 16 : i32
    %0 = arith.muli %arg1, %c16_i32 : i32
    %c0 = arith.constant 0 : index
    %c0_0 = arith.constant 0 : index
    %1 = vector.load %arg4[%c0, %c0_0] : memref<1x128xf32, #tpu.memory_space<vmem>>, vector<1x128xf32>
    %c0_i32 = arith.constant 0 : i32
    %2 = arith.addi %0, %c0_i32 : i32
    %c0_i32_1 = arith.constant 0 : i32
    %3 = arith.addi %2, %c0_i32_1 : i32
    %c16_i32_2 = arith.constant 16 : i32
    %4 = arith.muli %3, %c16_i32_2 : i32
    %5 = tpu.assume_multiple %4, 8 : i32
    %c0_3 = arith.constant 0 : index
    %6 = arith.index_cast %5 : i32 to index
    %c0_4 = arith.constant 0 : index
    %7 = vector.load %arg2[%c0_3, %6, %c0_4] : memref<1x288x12xbf16, #tpu.memory_space<vmem>>, vector<1x256x12xbf16>
    %8 = vector.shape_cast %7 : vector<1x256x12xbf16> to vector<256x12xbf16>
    %c0_5 = arith.constant 0 : index
    %c0_6 = arith.constant 0 : index
    %c0_7 = arith.constant 0 : index
    %9 = vector.load %arg3[%c0_5, %c0_6, %c0_7] : memref<3x12x128xbf16, #tpu.memory_space<vmem>>, vector<1x12x128xbf16>
    %10 = vector.shape_cast %9 : vector<1x12x128xbf16> to vector<12x128xbf16>
    %cst = arith.constant dense<0.000000e+00> : vector<256x128xf32>
    %11 = tpu.matmul %8, %10, %cst {dimension_numbers = #tpu.dot_dimension_numbers<[1], [0], [0], [1], [0, 0, 1, 1], [], []>} : vector<256x12xbf16>, vector<12x128xbf16>, vector<256x128xf32> -> vector<256x128xf32>
    %c1_i32 = arith.constant 1 : i32
    %12 = arith.addi %2, %c1_i32 : i32
    %c16_i32_8 = arith.constant 16 : i32
    %13 = arith.muli %12, %c16_i32_8 : i32
    %14 = tpu.assume_multiple %13, 8 : i32
    %c0_9 = arith.constant 0 : index
    %15 = arith.index_cast %14 : i32 to index
    %c0_10 = arith.constant 0 : index
    %16 = vector.load %arg2[%c0_9, %15, %c0_10] : memref<1x288x12xbf16, #tpu.memory_space<vmem>>, vector<1x256x12xbf16>
    %17 = vector.shape_cast %16 : vector<1x256x12xbf16> to vector<256x12xbf16>
    %c1 = arith.constant 1 : index
    %c0_11 = arith.constant 0 : index
    %c0_12 = arith.constant 0 : index
    %18 = vector.load %arg3[%c1, %c0_11, %c0_12] : memref<3x12x128xbf16, #tpu.memory_space<vmem>>, vector<1x12x128xbf16>
    %19 = vector.shape_cast %18 : vector<1x12x128xbf16> to vector<12x128xbf16>
    %cst_13 = arith.constant dense<0.000000e+00> : vector<256x128xf32>
    %20 = tpu.matmul %17, %19, %cst_13 {dimension_numbers = #tpu.dot_dimension_numbers<[1], [0], [0], [1], [0, 0, 1, 1], [], []>} : vector<256x12xbf16>, vector<12x128xbf16>, vector<256x128xf32> -> vector<256x128xf32>
    %21 = arith.addf %11, %20 : vector<256x128xf32>
    %c2_i32 = arith.constant 2 : i32
    %22 = arith.addi %2, %c2_i32 : i32
    %c16_i32_14 = arith.constant 16 : i32
    %23 = arith.muli %22, %c16_i32_14 : i32
    %24 = tpu.assume_multiple %23, 8 : i32
    %c0_15 = arith.constant 0 : index
    %25 = arith.index_cast %24 : i32 to index
    %c0_16 = arith.constant 0 : index
    %26 = vector.load %arg2[%c0_15, %25, %c0_16] : memref<1x288x12xbf16, #tpu.memory_space<vmem>>, vector<1x256x12xbf16>
    %27 = vector.shape_cast %26 : vector<1x256x12xbf16> to vector<256x12xbf16>
    %c2 = arith.constant 2 : index
    %c0_17 = arith.constant 0 : index
    %c0_18 = arith.constant 0 : index
    %28 = vector.load %arg3[%c2, %c0_17, %c0_18] : memref<3x12x128xbf16, #tpu.memory_space<vmem>>, vector<1x12x128xbf16>
    %29 = vector.shape_cast %28 : vector<1x12x128xbf16> to vector<12x128xbf16>
    %cst_19 = arith.constant dense<0.000000e+00> : vector<256x128xf32>
    %30 = tpu.matmul %27, %29, %cst_19 {dimension_numbers = #tpu.dot_dimension_numbers<[1], [0], [0], [1], [0, 0, 1, 1], [], []>} : vector<256x12xbf16>, vector<12x128xbf16>, vector<256x128xf32> -> vector<256x128xf32>
    %31 = arith.addf %21, %30 : vector<256x128xf32>
    %32 = vector.broadcast %1 : vector<1x128xf32> to vector<256x128xf32>
    %33 = arith.addf %31, %32 : vector<256x128xf32>
    %cst_20 = arith.constant 0.000000e+00 : f32
    %34 = vector.broadcast %cst_20 : f32 to vector<256x128xf32>
    %35 = arith.maximumf %33, %34 : vector<256x128xf32>
    %c0_21 = arith.constant 0 : index
    %c0_22 = arith.constant 0 : index
    %c0_23 = arith.constant 0 : index
    %36 = vector.load %arg5[%c0_21, %c0_22, %c0_23] : memref<1x256x128xf32, #tpu.memory_space<vmem>>, vector<1x256x128xf32>
    %37 = vector.shape_cast %36 : vector<1x256x128xf32> to vector<256x128xf32>
    %38 = vector.shape_cast %35 : vector<256x128xf32> to vector<1x256x128xf32>
    tpu.vector_store %arg5[%c0_21, %c0_22, %c0_23], %38 {strides = array<i32>} : memref<1x256x128xf32, #tpu.memory_space<vmem>>, vector<1x256x128xf32>,
    return
  }
  func.func @transform_0(%arg0: i32, %arg1: i32) -> (i32, i32, i32) {
    %c0_i32 = arith.constant 0 : i32
    %c0_i32_0 = arith.constant 0 : i32
    %c0_i32_1 = arith.constant 0 : i32
    return %arg0, %c0_i32, %c0_i32_0 : i32, i32, i32
  }
  func.func @transform_1(%arg0: i32, %arg1: i32) -> (i32, i32, i32) {
    %c0_i32 = arith.constant 0 : i32
    %c0_i32_0 = arith.constant 0 : i32
    %c0_i32_1 = arith.constant 0 : i32
    %c0_i32_2 = arith.constant 0 : i32
    return %c0_i32, %c0_i32_0, %c0_i32_1 : i32, i32, i32
  }
  func.func @transform_2(%arg0: i32, %arg1: i32) -> (i32, i32) {
    %c0_i32 = arith.constant 0 : i32
    %c0_i32_0 = arith.constant 0 : i32
    %c0_i32_1 = arith.constant 0 : i32
    return %c0_i32, %c0_i32_0 : i32, i32
  }
  func.func @transform_3(%arg0: i32, %arg1: i32) -> (i32, i32, i32) {
    %c0_i32 = arith.constant 0 : i32
    %c0_i32_0 = arith.constant 0 : i32
    return %arg0, %arg1, %c0_i32 : i32, i32, i32
  }
}

</mosaic_0001>

<llo_original>
// kernel: tpu_custom_call.1
$region0: #{tpu_custom_call.1}
  #allocation0 [shape = 'u32[]', space=smem, size = 0x4, offset = 0x4, fixed_abs, tag = 'smem constant byte address 0x4 - core index']
  #allocation1 [shape = 'u32[144,128]{1,0:T(1,128)}', space=vmem, size = 0x12000, scoped, tag = 'internal scratch']
  %s0 = inlined_call_operand.vmem [shape: bf16[2,288,12], index: 0, kind: input, shape index: {}]
  %s1 = inlined_call_operand.vmem [shape: bf16[3,12,128], index: 1, kind: input, shape index: {}]
  %s2 = inlined_call_operand.vmem [shape: f32[1,128], index: 2, kind: input, shape index: {}]
  %s3 = inlined_call_operand.hbm [shape: f32[2,256,128], index: 3, kind: output, shape index: {}]
  %s4 = sld [smem:[#allocation0]]
  $region45: #{tpu_custom_call.1} parent=0
    _
  %s6 = ssub.s32 1, %s4
  %s7 = scalar_select 0, %s6, %s4
  $region1: #{tpu_custom_call.1} parent=0
    #allocation2 [shape = 'u8[262144]{0}', space=vmem, size = 0x40000, scoped, tag = 'output window, operand 0']
    #allocation3 [shape = 's32[2]{0}', space=sflag, size = 0x8, scoped, tag = 'scoped memory for tpu_custom_call.1']
    %8 = vsyncpa [#allocation3], 0
    %s9 = scalar_lea.sflag [#allocation3], 1
    %10 = vsyncpa %s9, 0
    loop: start=0, step=1, limit=4
    $region2: #{tpu_custom_call.1} parent=1 // loop_pre_header
      _
    $region3: #{tpu_custom_call.1} parent=1 // loop_header
      %s12 = sphi 0, %s16
      %p13 = scmp.ge.s32.totalorder %s12, 4
      %s19 = sphi 0, %s31
      %s20 = sphi 0, %s27
      %s21 = sphi 0, %s19
      %s22 = sphi 0, %s20
      %s23 = sphi 0, %s21
      %s24 = sphi 0, %s22
      %s34 = sphi 0, %s36
      %s37 = sphi 0, %s34
      %s38 = sphi 0, %s37
      %s54 = sphi 0, %s38
      %s58 = sphi 0, %s58
      %s60 = sphi 0, %s58
      %s61 = sphi 0, %s60
      %s75 = sphi 0, %s61
      %s79 = sphi 0, %s79
      %s81 = sphi 0, %s79
      %s82 = sphi 0, %s81
      %s96 = sphi 0, %s82
      %s104 = sphi 0, %s106
      %s107 = sphi 0, %s104
      %s108 = sphi 0, %s107
      %s124 = sphi 0, %s108
    $region4: #{tpu_custom_call.1} parent=1 // loop_header_branch
      %15 = sbr.rel (%p13) target = $region8
    $region5: #{tpu_custom_call.1} parent=1 // loop_body
      %s17 = ssub.s32 %s12, 1
      %s18 = ssub.s32 %s12, 2
      %s25 = sadd.s32 1, %s20
      %p26 = scmp.ge.s32.totalorder %s25, 1
      %s27 = scalar_select %p26, 0, %s25
      %s28 = sadd.s32 1, %s19
      %s29 = scalar_select %p26, %s28, %s19
      %p30 = scmp.ge.s32.totalorder %s29, 2
      %s31 = scalar_select %p30, 0, %s29
      %s32 = ssub.s32 %s19, %s31
      %p33 = scmp.eq.s32.totalorder %s32, 0
      %s35 = sadd.s32 %s34, 1
      %s36 = scalar_select %p33, %s34, %s35
      %p39 = pneg %p33
      %p40 = scmp.eq.s32.totalorder %s12, 1
      %p41 = por %p39, %p40
      %p42 = scmp.ne.s32.totalorder %s34, %s37
      %p43 = scmp.eq.s32.totalorder %s12, 0
      %p44 = por %p42, %p43
      %p45 = scmp.ne.s32.totalorder %s34, %s37
      %p46 = scmp.eq.s32.totalorder %s17, 1
      %p47 = por %p45, %p46
      %p48 = scmp.ne.s32.totalorder %s37, %s38
      %p49 = scmp.eq.s32.totalorder %s17, 0
      %p50 = por %p48, %p49
      %p51 = scmp.ne.s32.totalorder %s37, %s38
      %p52 = scmp.eq.s32.totalorder %s18, 1
      %p53 = por %p51, %p52
      %p55 = scmp.ne.s32.totalorder %s38, %s54
      %p56 = scmp.eq.s32.totalorder %s18, 0
      %p57 = por %p55, %p56
      %s59 = sadd.s32 %s58, 1
      %p62 = scmp.eq.s32.totalorder %s12, 1
      %p63 = scmp.ne.s32.totalorder %s58, %s60
      %p64 = scmp.eq.s32.totalorder %s12, 0
      %p65 = por %p63, %p64
      %p66 = scmp.ne.s32.totalorder %s58, %s60
      %p67 = scmp.eq.s32.totalorder %s17, 1
      %p68 = por %p66, %p67
      %p69 = scmp.ne.s32.totalorder %s60, %s61
      %p70 = scmp.eq.s32.totalorder %s17, 0
      %p71 = por %p69, %p70
      %p72 = scmp.ne.s32.totalorder %s60, %s61
      %p73 = scmp.eq.s32.totalorder %s18, 1
      %p74 = por %p72, %p73
      %p76 = scmp.ne.s32.totalorder %s61, %s75
      %p77 = scmp.eq.s32.totalorder %s18, 0
      %p78 = por %p76, %p77
      %s80 = sadd.s32 %s79, 1
      %p83 = scmp.eq.s32.totalorder %s12, 1
      %p84 = scmp.ne.s32.totalorder %s79, %s81
      %p85 = scmp.eq.s32.totalorder %s12, 0
      %p86 = por %p84, %p85
      %p87 = scmp.ne.s32.totalorder %s79, %s81
      %p88 = scmp.eq.s32.totalorder %s17, 1
      %p89 = por %p87, %p88
      %p90 = scmp.ne.s32.totalorder %s81, %s82
      %p91 = scmp.eq.s32.totalorder %s17, 0
      %p92 = por %p90, %p91
      %p93 = scmp.ne.s32.totalorder %s81, %s82
      %p94 = scmp.eq.s32.totalorder %s18, 1
      %p95 = por %p93, %p94
      %p97 = scmp.ne.s32.totalorder %s82, %s96
      %p98 = scmp.eq.s32.totalorder %s18, 0
      %p99 = por %p97, %p98
      %s100 = ssub.s32 %s19, %s31
      %s101 = ssub.s32 %s20, %s27
      %s102 = sor.u32 %s100, %s101
      %p103 = scmp.eq.s32.totalorder %s102, 0
      %s105 = sadd.s32 %s104, 1
      %s106 = scalar_select %p103, %s104, %s105
      %p109 = pneg %p103
      %p110 = scmp.eq.s32.totalorder %s12, 1
      %p111 = por %p109, %p110
      %p112 = scmp.ne.s32.totalorder %s104, %s107
      %p113 = scmp.eq.s32.totalorder %s12, 0
      %p114 = por %p112, %p113
      %p115 = scmp.ne.s32.totalorder %s104, %s107
      %p116 = scmp.eq.s32.totalorder %s17, 1
      %p117 = por %p115, %p116
      %p118 = scmp.ne.s32.totalorder %s107, %s108
      %p119 = scmp.eq.s32.totalorder %s17, 0
      %p120 = por %p118, %p119
      %p121 = scmp.ne.s32.totalorder %s107, %s108
      %p122 = scmp.eq.s32.totalorder %s18, 1
      %p123 = por %p121, %p122
      %p125 = scmp.ne.s32.totalorder %s108, %s124
      %p126 = scmp.eq.s32.totalorder %s18, 0
      %p127 = por %p125, %p126
      %p128 = scmp.le.s32.totalorder 1, %s12
      %p129 = scmp.lt.s32.totalorder %s12, 3
      %p130 = pnand %p128, %p129
      %p131 = pneg %p130
      // Predicated region
      $region9: #{tpu_custom_call.1} parent=5 // pred_check
        _
      $region10: #{tpu_custom_call.1} parent=5 // pred_check_branch
        %133 = sbr.rel (%p130) target = $region12
      $region11: #{tpu_custom_call.1} parent=5 // pred_region
        %s134 = ssub.s32 %s12, 1
        // Predicated region
        $region13: #{tpu_custom_call.1} parent=11 // pred_check
          %p135 = pneg %p71
        $region14: #{tpu_custom_call.1} parent=11 // pred_check_branch
          %137 = sbr.rel (%p135) target = $region16
        $region15: #{tpu_custom_call.1} parent=11 // pred_region
          _
        $region16: #{tpu_custom_call.1} parent=11 // pred_fallthru
          _
        // Predicated region
        $region17: #{tpu_custom_call.1} parent=11 // pred_check
          %p138 = pneg %p92
        $region18: #{tpu_custom_call.1} parent=11 // pred_check_branch
          %140 = sbr.rel (%p138) target = $region20
        $region19: #{tpu_custom_call.1} parent=11 // pred_region
          _
        $region20: #{tpu_custom_call.1} parent=11 // pred_fallthru
          _
      $region12: #{tpu_custom_call.1} parent=5 // pred_fallthru
        _
      %p141 = scmp.lt.s32.totalorder %s12, 2
      // Predicated region
      $region21: #{tpu_custom_call.1} parent=5 // pred_check
        %p142 = pneg %p141
      $region22: #{tpu_custom_call.1} parent=5 // pred_check_branch
        %144 = sbr.rel (%p142) target = $region24
      $region23: #{tpu_custom_call.1} parent=5 // pred_region
        // Predicated region
        $region25: #{tpu_custom_call.1} parent=23 // pred_check
          %p145 = pneg %p44
        $region26: #{tpu_custom_call.1} parent=23 // pred_check_branch
          %147 = sbr.rel (%p145) target = $region28
        $region27: #{tpu_custom_call.1} parent=23 // pred_region
          %p148 = scmp.lt.s32.totalorder %s19, 1
          %s149 = scalar_select %p148, %s19, 1
          %s150 = smul.addr %s149, 36
          %s151 = smul.addr %s150, 4
          %s152 = scalar_lea.vmem %s0, %s151
        $region28: #{tpu_custom_call.1} parent=23 // pred_fallthru
          _
      $region24: #{tpu_custom_call.1} parent=5 // pred_fallthru
        _
      %p153 = scmp.le.s32.totalorder 1, %s12
      %p154 = scmp.lt.s32.totalorder %s12, 3
      %p155 = pnand %p153, %p154
      %p156 = pneg %p155
      // Predicated region
      $region29: #{tpu_custom_call.1} parent=5 // pred_check
        _
      $region30: #{tpu_custom_call.1} parent=5 // pred_check_branch
        %158 = sbr.rel (%p155) target = $region32
      $region31: #{tpu_custom_call.1} parent=5 // pred_region
        %s159 = ssub.s32 %s12, 1
        %p160 = scmp.lt.s32.totalorder %s21, 1
        %s161 = scalar_select %p160, %s21, 1
        %s162 = smul.addr %s161, 36
        %s163 = smul.addr %s162, 4
        %s164 = scalar_lea.vmem %s0, %s163
        %p165 = pneg %p50
        %p166 = pneg %p47
        %p167 = pneg %p71
        %p168 = pneg %p68
        %p169 = pneg %p92
        %p170 = pneg %p89
        %p171 = pneg %p120
        %p172 = pneg %p117
        %s173 = sand.u32 %s107, 1
        %s174 = scalar_lea.sflag [#allocation3], %s173
        %s175 = sand.u32 %s107, 1
        %s176 = smul.addr %s175, 256
        %s177 = scalar_lea.vmem [#allocation2], %s176
        %p178 = scmp.lt.s32.totalorder %s21, 1
        %s179 = scalar_select %p178, %s21, 1
        %s180 = smul.addr %s179, 36
        %s181 = smul.addr %s180, 4
        %s182 = scalar_lea.vmem %s0, %s181
        %s183 = smul.u32 32, %s22
        %s185 = smul.u32 %s22, 16
        %v186 = vld [vmem:[%s2] sm:$0x1]
        %s187 = smul.u32 %s22, 256
        %s188 = sshra.s32 %s187, 3
        %s189 = sand.u32 %s187, 7
        %s190 = smul.addr %s188, 4
        %s191 = scalar_lea.vmem %s182, %s190
        %v192 = vld [vmem:[%s191] sm:$0xf]
        %v193 = vld [vmem:[%s191 + $0x4] sm:$0xf]
        %v194 = vld [vmem:[%s191 + $0x8] sm:$0xf]
        %v195 = vld [vmem:[%s191 + $0xc] sm:$0xf]
        %v196 = vld [vmem:[%s191 + $0x10] sm:$0xf]
        %v197 = vld [vmem:[%s191 + $0x14] sm:$0xf]
        %v198 = vld [vmem:[%s191 + $0x18] sm:$0xf]
        %v199 = vld [vmem:[%s191 + $0x1c] sm:$0xf]
        %v200 = vld [vmem:[%s191 + $0x20] sm:$0xf]
        %v201 = vld [vmem:[%s191 + $0x24] sm:$0xf]
        %v202 = vld [vmem:[%s191 + $0x28] sm:$0xf]
        %v203 = vld [vmem:[%s191 + $0x2c] sm:$0xf]
        %v204 = vld [vmem:[%s191 + $0x30] sm:$0xf]
        %v205 = vld [vmem:[%s191 + $0x34] sm:$0xf]
        %v206 = vld [vmem:[%s191 + $0x38] sm:$0xf]
        %v207 = vld [vmem:[%s191 + $0x3c] sm:$0xf]
        %v208 = vld [vmem:[%s191 + $0x40] sm:$0xf]
        %v209 = vld [vmem:[%s191 + $0x44] sm:$0xf]
        %v210 = vld [vmem:[%s191 + $0x48] sm:$0xf]
        %v211 = vld [vmem:[%s191 + $0x4c] sm:$0xf]
        %v212 = vld [vmem:[%s191 + $0x50] sm:$0xf]
        %v213 = vld [vmem:[%s191 + $0x54] sm:$0xf]
        %v214 = vld [vmem:[%s191 + $0x58] sm:$0xf]
        %v215 = vld [vmem:[%s191 + $0x5c] sm:$0xf]
        %v216 = vld [vmem:[%s191 + $0x60] sm:$0xf]
        %v217 = vld [vmem:[%s191 + $0x64] sm:$0xf]
        %v218 = vld [vmem:[%s191 + $0x68] sm:$0xf]
        %v219 = vld [vmem:[%s191 + $0x6c] sm:$0xf]
        %v220 = vld [vmem:[%s191 + $0x70] sm:$0xf]
        %v221 = vld [vmem:[%s191 + $0x74] sm:$0xf]
        %v222 = vld [vmem:[%s191 + $0x78] sm:$0xf]
        %v223 = vld [vmem:[%s191 + $0x7c] sm:$0xf]
        %v224 = vld [vmem:[%s1] sm:$0xf]
        %v225 = vld [vmem:[%s1 + $0x4] sm:$0x3]
        %s226 = sadd.s32 %s185, 1
        %s227 = smul.u32 %s226, 16
        %s228 = sshra.s32 %s227, 3
        %s229 = sand.u32 %s227, 7
        %s230 = smul.addr %s228, 4
        %s231 = scalar_lea.vmem %s182, %s230
        %v232 = vld [vmem:[%s231] sm:$0xf]
        %v233 = vld [vmem:[%s231 + $0x4] sm:$0xf]
        %v234 = vld [vmem:[%s231 + $0x8] sm:$0xf]
        %v235 = vld [vmem:[%s231 + $0xc] sm:$0xf]
        %v236 = vld [vmem:[%s231 + $0x10] sm:$0xf]
        %v237 = vld [vmem:[%s231 + $0x14] sm:$0xf]
        %v238 = vld [vmem:[%s231 + $0x18] sm:$0xf]
        %v239 = vld [vmem:[%s231 + $0x1c] sm:$0xf]
        %v240 = vld [vmem:[%s231 + $0x20] sm:$0xf]
        %v241 = vld [vmem:[%s231 + $0x24] sm:$0xf]
        %v242 = vld [vmem:[%s231 + $0x28] sm:$0xf]
        %v243 = vld [vmem:[%s231 + $0x2c] sm:$0xf]
        %v244 = vld [vmem:[%s231 + $0x30] sm:$0xf]
        %v245 = vld [vmem:[%s231 + $0x34] sm:$0xf]
        %v246 = vld [vmem:[%s231 + $0x38] sm:$0xf]
        %v247 = vld [vmem:[%s231 + $0x3c] sm:$0xf]
        %v248 = vld [vmem:[%s231 + $0x40] sm:$0xf]
        %v249 = vld [vmem:[%s231 + $0x44] sm:$0xf]
        %v250 = vld [vmem:[%s231 + $0x48] sm:$0xf]
        %v251 = vld [vmem:[%s231 + $0x4c] sm:$0xf]
        %v252 = vld [vmem:[%s231 + $0x50] sm:$0xf]
        %v253 = vld [vmem:[%s231 + $0x54] sm:$0xf]
        %v254 = vld [vmem:[%s231 + $0x58] sm:$0xf]
        %v255 = vld [vmem:[%s231 + $0x5c] sm:$0xf]
        %v256 = vld [vmem:[%s231 + $0x60] sm:$0xf]
        %v257 = vld [vmem:[%s231 + $0x64] sm:$0xf]
        %v258 = vld [vmem:[%s231 + $0x68] sm:$0xf]
        %v259 = vld [vmem:[%s231 + $0x6c] sm:$0xf]
        %v260 = vld [vmem:[%s231 + $0x70] sm:$0xf]
        %v261 = vld [vmem:[%s231 + $0x74] sm:$0xf]
        %v262 = vld [vmem:[%s231 + $0x78] sm:$0xf]
        %v263 = vld [vmem:[%s231 + $0x7c] sm:$0xf]
        %s264 = scalar_lea.vmem %s1, 8
        %v265 = vld [vmem:[%s264] sm:$0xf]
        %v266 = vld [vmem:[%s264 + $0x4] sm:$0x3]
        %v299 = vunpack.c.l.b16 %v232
        %v300 = vunpack.c.l.b16 %v233
        %v301 = vunpack.c.l.b16 %v234
        %v302 = vunpack.c.l.b16 %v235
        %v303 = vunpack.c.l.b16 %v236
        %v304 = vunpack.c.l.b16 %v237
        %v305 = vunpack.c.l.b16 %v238
        %v306 = vunpack.c.l.b16 %v239
        %v307 = vunpack.c.l.b16 %v240
        %v308 = vunpack.c.l.b16 %v241
        %v309 = vunpack.c.l.b16 %v242
        %v310 = vunpack.c.l.b16 %v243
        %v311 = vunpack.c.l.b16 %v244
        %v312 = vunpack.c.l.b16 %v245
        %v313 = vunpack.c.l.b16 %v246
        %v314 = vunpack.c.l.b16 %v247
        %v315 = vunpack.c.l.b16 %v248
        %v316 = vunpack.c.l.b16 %v249
        %v317 = vunpack.c.l.b16 %v250
        %v318 = vunpack.c.l.b16 %v251
        %v319 = vunpack.c.l.b16 %v252
        %v320 = vunpack.c.l.b16 %v253
        %v321 = vunpack.c.l.b16 %v254
        %v322 = vunpack.c.l.b16 %v255
        %v323 = vunpack.c.l.b16 %v256
        %v324 = vunpack.c.l.b16 %v257
        %v325 = vunpack.c.l.b16 %v258
        %v326 = vunpack.c.l.b16 %v259
        %v327 = vunpack.c.l.b16 %v260
        %v328 = vunpack.c.l.b16 %v261
        %v329 = vunpack.c.l.b16 %v262
        %v330 = vunpack.c.l.b16 %v263
        %v331 = vpack.c.b16 %v300, %v299
        %v332 = vpack.c.b16 %v302, %v301
        %v333 = vpack.c.b16 %v304, %v303
        %v334 = vpack.c.b16 %v306, %v305
        %v335 = vpack.c.b16 %v308, %v307
        %v336 = vpack.c.b16 %v310, %v309
        %v337 = vpack.c.b16 %v312, %v311
        %v338 = vpack.c.b16 %v314, %v313
        %v339 = vpack.c.b16 %v316, %v315
        %v340 = vpack.c.b16 %v318, %v317
        %v341 = vpack.c.b16 %v320, %v319
        %v342 = vpack.c.b16 %v322, %v321
        %v343 = vpack.c.b16 %v324, %v323
        %v344 = vpack.c.b16 %v326, %v325
        %v345 = vpack.c.b16 %v328, %v327
        %v346 = vpack.c.b16 %v330, %v329
        %v349 = vunpack.c.l.b16 %v265
        %v350 = vunpack.c.l.b16 %v266
        %v351 = vpack.c.b16 %v350, %v349
        %vm352 = vcmask 97280
        %v354 = vsel %vm352, %v331, 0
        %v357 = vsel %vm352, %v332, 0
        %v360 = vsel %vm352, %v333, 0
        %v363 = vsel %vm352, %v334, 0
        %v366 = vsel %vm352, %v335, 0
        %v369 = vsel %vm352, %v336, 0
        %v372 = vsel %vm352, %v337, 0
        %v375 = vsel %vm352, %v338, 0
        %v378 = vsel %vm352, %v339, 0
        %v381 = vsel %vm352, %v340, 0
        %v384 = vsel %vm352, %v341, 0
        %v387 = vsel %vm352, %v342, 0
        %v390 = vsel %vm352, %v343, 0
        %v393 = vsel %vm352, %v344, 0
        %v396 = vsel %vm352, %v345, 0
        %v399 = vsel %vm352, %v346, 0
        %vm401 = vcmask 1045504
        %v403 = vsel %vm401, %v351, 0
        %405 = vmatprep.subr.bf16.mxu0 0
        %406 = vmatpush1.bf16.msra.mxu0 %v403
        %407 = vmatprep.subr.bf16.mxu0 0
        %408 = vmatpush1.bf16.msra.mxu0 0
        %409 = vmatprep.subr.bf16.mxu0 0
        %410 = vmatpush1.bf16.msra.mxu0 0
        %411 = vmatprep.subr.bf16.mxu0 0
        %412 = vmatpush1.bf16.msra.mxu0 0
        %413 = vmatprep.subr.bf16.mxu0 0
        %414 = vmatpush1.bf16.msra.mxu0 0
        %415 = vmatprep.subr.bf16.mxu0 0
        %416 = vmatpush1.bf16.msra.mxu0 0
        %417 = vmatprep.subr.bf16.mxu0 0
        %418 = vmatpush1.bf16.msra.mxu0 0
        %419 = vmatprep.subr.bf16.mxu0 0
        %420 = vmatpush1.bf16.msra.mxu0 0
        %421 = vmatprep.subr.bf16.mxu0 0
        %422 = vmatpush1.bf16.msra.mxu0 0
        %423 = vmatprep.subr.bf16.mxu0 0
        %424 = vmatpush1.bf16.msra.mxu0 0
        %425 = vmatprep.subr.bf16.mxu0 0
        %426 = vmatpush1.bf16.msra.mxu0 0
        %427 = vmatprep.subr.bf16.mxu0 0
        %428 = vmatpush1.bf16.msra.mxu0 0
        %429 = vmatprep.subr.bf16.mxu0 0
        %430 = vmatpush1.bf16.msra.mxu0 0
        %431 = vmatprep.subr.bf16.mxu0 0
        %432 = vmatpush1.bf16.msra.mxu0 0
        %433 = vmatprep.subr.bf16.mxu0 0
        %434 = vmatpush1.bf16.msra.mxu0 0
        %435 = vmatprep.subr.bf16.mxu0 0
        %436 = vmatpush1.bf16.msra.mxu0 0
        %437 = vmatprep.mubr.bf16.mxu0 0
        %438 = vmatmul.mubr.bf16.gmra.mrb[0].mxu0 %v354
        %v439 = vpop.f32.mrb[0].mxu0
        %v440 = vadd.f32 0.0, %v439
        %v441 = vpop.f32.mrb[0].mxu0
        %v442 = vpop.f32.mrb[0].mxu0
        %v443 = vadd.f32 0.0, %v442
        %v444 = vpop.f32.mrb[0].mxu0
        %445 = vmatprep.mubr.bf16.mxu0 0
        %446 = vmatmul.mubr.bf16.gmra.mrb[0].mxu0 %v357
        %v447 = vpop.f32.mrb[0].mxu0
        %v448 = vadd.f32 0.0, %v447
        %v449 = vpop.f32.mrb[0].mxu0
        %v450 = vpop.f32.mrb[0].mxu0
        %v451 = vadd.f32 0.0, %v450
        %v452 = vpop.f32.mrb[0].mxu0
        %453 = vmatprep.mubr.bf16.mxu0 0
        %454 = vmatmul.mubr.bf16.gmra.mrb[0].mxu0 %v360
        %v455 = vpop.f32.mrb[0].mxu0
        %v456 = vadd.f32 0.0, %v455
        %v457 = vpop.f32.mrb[0].mxu0
        %v458 = vpop.f32.mrb[0].mxu0
        %v459 = vadd.f32 0.0, %v458
        %v460 = vpop.f32.mrb[0].mxu0
        %461 = vmatprep.mubr.bf16.mxu0 0
        %462 = vmatmul.mubr.bf16.gmra.mrb[0].mxu0 %v363
        %v463 = vpop.f32.mrb[0].mxu0
        %v464 = vadd.f32 0.0, %v463
        %v465 = vpop.f32.mrb[0].mxu0
        %v466 = vpop.f32.mrb[0].mxu0
        %v467 = vadd.f32 0.0, %v466
        %v468 = vpop.f32.mrb[0].mxu0
        %469 = vmatprep.mubr.bf16.mxu0 0
        %470 = vmatmul.mubr.bf16.gmra.mrb[0].mxu0 %v366
        %v471 = vpop.f32.mrb[0].mxu0
        %v472 = vadd.f32 0.0, %v471
        %v473 = vpop.f32.mrb[0].mxu0
        %v474 = vpop.f32.mrb[0].mxu0
        %v475 = vadd.f32 0.0, %v474
        %v476 = vpop.f32.mrb[0].mxu0
        %477 = vmatprep.mubr.bf16.mxu0 0
        %478 = vmatmul.mubr.bf16.gmra.mrb[0].mxu0 %v369
        %v479 = vpop.f32.mrb[0].mxu0
        %v480 = vadd.f32 0.0, %v479
        %v481 = vpop.f32.mrb[0].mxu0
        %v482 = vpop.f32.mrb[0].mxu0
        %v483 = vadd.f32 0.0, %v482
        %v484 = vpop.f32.mrb[0].mxu0
        %485 = vmatprep.mubr.bf16.mxu0 0
        %486 = vmatmul.mubr.bf16.gmra.mrb[0].mxu0 %v372
        %v487 = vpop.f32.mrb[0].mxu0
        %v488 = vadd.f32 0.0, %v487
        %v489 = vpop.f32.mrb[0].mxu0
        %v490 = vpop.f32.mrb[0].mxu0
        %v491 = vadd.f32 0.0, %v490
        %v492 = vpop.f32.mrb[0].mxu0
        %493 = vmatprep.mubr.bf16.mxu0 0
        %494 = vmatmul.mubr.bf16.gmra.mrb[0].mxu0 %v375
        %v495 = vpop.f32.mrb[0].mxu0
        %v496 = vadd.f32 0.0, %v495
        %v497 = vpop.f32.mrb[0].mxu0
        %v498 = vpop.f32.mrb[0].mxu0
        %v499 = vadd.f32 0.0, %v498
        %v500 = vpop.f32.mrb[0].mxu0
        %501 = vmatprep.mubr.bf16.mxu0 0
        %502 = vmatmul.mubr.bf16.gmra.mrb[0].mxu0 %v378
        %v503 = vpop.f32.mrb[0].mxu0
        %v504 = vadd.f32 0.0, %v503
        %v505 = vpop.f32.mrb[0].mxu0
        %v506 = vpop.f32.mrb[0].mxu0
        %v507 = vadd.f32 0.0, %v506
        %v508 = vpop.f32.mrb[0].mxu0
        %509 = vmatprep.mubr.bf16.mxu0 0
        %510 = vmatmul.mubr.bf16.gmra.mrb[0].mxu0 %v381
        %v511 = vpop.f32.mrb[0].mxu0
        %v512 = vadd.f32 0.0, %v511
        %v513 = vpop.f32.mrb[0].mxu0
        %v514 = vpop.f32.mrb[0].mxu0
        %v515 = vadd.f32 0.0, %v514
        %v516 = vpop.f32.mrb[0].mxu0
        %517 = vmatprep.mubr.bf16.mxu0 0
        %518 = vmatmul.mubr.bf16.gmra.mrb[0].mxu0 %v384
        %v519 = vpop.f32.mrb[0].mxu0
        %v520 = vadd.f32 0.0, %v519
        %v521 = vpop.f32.mrb[0].mxu0
        %v522 = vpop.f32.mrb[0].mxu0
        %v523 = vadd.f32 0.0, %v522
        %v524 = vpop.f32.mrb[0].mxu0
        %525 = vmatprep.mubr.bf16.mxu0 0
        %526 = vmatmul.mubr.bf16.gmra.mrb[0].mxu0 %v387
        %v527 = vpop.f32.mrb[0].mxu0
        %v528 = vadd.f32 0.0, %v527
        %v529 = vpop.f32.mrb[0].mxu0
        %v530 = vpop.f32.mrb[0].mxu0
        %v531 = vadd.f32 0.0, %v530
        %v532 = vpop.f32.mrb[0].mxu0
        %533 = vmatprep.mubr.bf16.mxu0 0
        %534 = vmatmul.mubr.bf16.gmra.mrb[0].mxu0 %v390
        %v535 = vpop.f32.mrb[0].mxu0
        %v536 = vadd.f32 0.0, %v535
        %v537 = vpop.f32.mrb[0].mxu0
        %v538 = vpop.f32.mrb[0].mxu0
        %v539 = vadd.f32 0.0, %v538
        %v540 = vpop.f32.mrb[0].mxu0
        %541 = vmatprep.mubr.bf16.mxu0 0
        %542 = vmatmul.mubr.bf16.gmra.mrb[0].mxu0 %v393
        %v543 = vpop.f32.mrb[0].mxu0
        %v544 = vadd.f32 0.0, %v543
        %v545 = vpop.f32.mrb[0].mxu0
        %v546 = vpop.f32.mrb[0].mxu0
        %v547 = vadd.f32 0.0, %v546
        %v548 = vpop.f32.mrb[0].mxu0
        %549 = vmatprep.mubr.bf16.mxu0 0
        %550 = vmatmul.mubr.bf16.gmra.mrb[0].mxu0 %v396
        %v551 = vpop.f32.mrb[0].mxu0
        %v552 = vadd.f32 0.0, %v551
        %v553 = vpop.f32.mrb[0].mxu0
        %v554 = vpop.f32.mrb[0].mxu0
        %v555 = vadd.f32 0.0, %v554
        %v556 = vpop.f32.mrb[0].mxu0
        %557 = vmatprep.mubr.bf16.mxu0 0
        %558 = vmatmul.mubr.bf16.gmra.mrb[0].mxu0 %v399
        %v559 = vpop.f32.mrb[0].mxu0
        %v560 = vadd.f32 0.0, %v559
        %v561 = vpop.f32.mrb[0].mxu0
        %v562 = vpop.f32.mrb[0].mxu0
        %v563 = vadd.f32 0.0, %v562
        %v564 = vpop.f32.mrb[0].mxu0
        %565 = vdwg.mxu0
        %v598 = vunpack.c.l.b16 %v192
        %v599 = vunpack.c.l.b16 %v193
        %v600 = vunpack.c.l.b16 %v194
        %v601 = vunpack.c.l.b16 %v195
        %v602 = vunpack.c.l.b16 %v196
        %v603 = vunpack.c.l.b16 %v197
        %v604 = vunpack.c.l.b16 %v198
        %v605 = vunpack.c.l.b16 %v199
        %v606 = vunpack.c.l.b16 %v200
        %v607 = vunpack.c.l.b16 %v201
        %v608 = vunpack.c.l.b16 %v202
        %v609 = vunpack.c.l.b16 %v203
        %v610 = vunpack.c.l.b16 %v204
        %v611 = vunpack.c.l.b16 %v205
        %v612 = vunpack.c.l.b16 %v206
        %v613 = vunpack.c.l.b16 %v207
        %v614 = vunpack.c.l.b16 %v208
        %v615 = vunpack.c.l.b16 %v209
        %v616 = vunpack.c.l.b16 %v210
        %v617 = vunpack.c.l.b16 %v211
        %v618 = vunpack.c.l.b16 %v212
        %v619 = vunpack.c.l.b16 %v213
        %v620 = vunpack.c.l.b16 %v214
        %v621 = vunpack.c.l.b16 %v215
        %v622 = vunpack.c.l.b16 %v216
        %v623 = vunpack.c.l.b16 %v217
        %v624 = vunpack.c.l.b16 %v218
        %v625 = vunpack.c.l.b16 %v219
        %v626 = vunpack.c.l.b16 %v220
        %v627 = vunpack.c.l.b16 %v221
        %v628 = vunpack.c.l.b16 %v222
        %v629 = vunpack.c.l.b16 %v223
        %v630 = vpack.c.b16 %v599, %v598
        %v631 = vpack.c.b16 %v601, %v600
        %v632 = vpack.c.b16 %v603, %v602
        %v633 = vpack.c.b16 %v605, %v604
        %v634 = vpack.c.b16 %v607, %v606
        %v635 = vpack.c.b16 %v609, %v608
        %v636 = vpack.c.b16 %v611, %v610
        %v637 = vpack.c.b16 %v613, %v612
        %v638 = vpack.c.b16 %v615, %v614
        %v639 = vpack.c.b16 %v617, %v616
        %v640 = vpack.c.b16 %v619, %v618
        %v641 = vpack.c.b16 %v621, %v620
        %v642 = vpack.c.b16 %v623, %v622
        %v643 = vpack.c.b16 %v625, %v624
        %v644 = vpack.c.b16 %v627, %v626
        %v645 = vpack.c.b16 %v629, %v628
        %v648 = vunpack.c.l.b16 %v224
        %v649 = vunpack.c.l.b16 %v225
        %v650 = vpack.c.b16 %v649, %v648
        %v652 = vsel %vm352, %v630, 0
        %v655 = vsel %vm352, %v631, 0
        %v658 = vsel %vm352, %v632, 0
        %v661 = vsel %vm352, %v633, 0
        %v664 = vsel %vm352, %v634, 0
        %v667 = vsel %vm352, %v635, 0
        %v670 = vsel %vm352, %v636, 0
        %v673 = vsel %vm352, %v637, 0
        %v676 = vsel %vm352, %v638, 0
        %v679 = vsel %vm352, %v639, 0
        %v682 = vsel %vm352, %v640, 0
        %v685 = vsel %vm352, %v641, 0
        %v688 = vsel %vm352, %v642, 0
        %v691 = vsel %vm352, %v643, 0
        %v694 = vsel %vm352, %v644, 0
        %v697 = vsel %vm352, %v645, 0
        %v700 = vsel %vm401, %v650, 0
        %702 = vmatprep.subr.bf16.mxu0 0
        %703 = vmatpush1.bf16.msra.mxu0 %v700
        %704 = vmatprep.subr.bf16.mxu0 0
        %705 = vmatpush1.bf16.msra.mxu0 0
        %706 = vmatprep.subr.bf16.mxu0 0
        %707 = vmatpush1.bf16.msra.mxu0 0
        %708 = vmatprep.subr.bf16.mxu0 0
        %709 = vmatpush1.bf16.msra.mxu0 0
        %710 = vmatprep.subr.bf16.mxu0 0
        %711 = vmatpush1.bf16.msra.mxu0 0
        %712 = vmatprep.subr.bf16.mxu0 0
        %713 = vmatpush1.bf16.msra.mxu0 0
        %714 = vmatprep.subr.bf16.mxu0 0
        %715 = vmatpush1.bf16.msra.mxu0 0
        %716 = vmatprep.subr.bf16.mxu0 0
        %717 = vmatpush1.bf16.msra.mxu0 0
        %718 = vmatprep.subr.bf16.mxu0 0
        %719 = vmatpush1.bf16.msra.mxu0 0
        %720 = vmatprep.subr.bf16.mxu0 0
        %721 = vmatpush1.bf16.msra.mxu0 0
        %722 = vmatprep.subr.bf16.mxu0 0
        %723 = vmatpush1.bf16.msra.mxu0 0
        %724 = vmatprep.subr.bf16.mxu0 0
        %725 = vmatpush1.bf16.msra.mxu0 0
        %726 = vmatprep.subr.bf16.mxu0 0
        %727 = vmatpush1.bf16.msra.mxu0 0
        %728 = vmatprep.subr.bf16.mxu0 0
        %729 = vmatpush1.bf16.msra.mxu0 0
        %730 = vmatprep.subr.bf16.mxu0 0
        %731 = vmatpush1.bf16.msra.mxu0 0
        %732 = vmatprep.subr.bf16.mxu0 0
        %733 = vmatpush1.bf16.msra.mxu0 0
        %734 = vmatprep.mubr.bf16.mxu0 0
        %735 = vmatmul.mubr.bf16.gmra.mrb[0].mxu0 %v652
        %v736 = vpop.f32.mrb[0].mxu0
        %v737 = vadd.f32 %v440, %v736
        %v738 = vpop.f32.mrb[0].mxu0
        %v739 = vpop.f32.mrb[0].mxu0
        %v740 = vadd.f32 %v443, %v739
        %v741 = vpop.f32.mrb[0].mxu0
        %742 = vmatprep.mubr.bf16.mxu0 0
        %743 = vmatmul.mubr.bf16.gmra.mrb[0].mxu0 %v655
        %v744 = vpop.f32.mrb[0].mxu0
        %v745 = vadd.f32 %v448, %v744
        %v746 = vpop.f32.mrb[0].mxu0
        %v747 = vpop.f32.mrb[0].mxu0
        %v748 = vadd.f32 %v451, %v747
        %v749 = vpop.f32.mrb[0].mxu0
        %750 = vmatprep.mubr.bf16.mxu0 0
        %751 = vmatmul.mubr.bf16.gmra.mrb[0].mxu0 %v658
        %v752 = vpop.f32.mrb[0].mxu0
        %v753 = vadd.f32 %v456, %v752
        %v754 = vpop.f32.mrb[0].mxu0
        %v755 = vpop.f32.mrb[0].mxu0
        %v756 = vadd.f32 %v459, %v755
        %v757 = vpop.f32.mrb[0].mxu0
        %758 = vmatprep.mubr.bf16.mxu0 0
        %759 = vmatmul.mubr.bf16.gmra.mrb[0].mxu0 %v661
        %v760 = vpop.f32.mrb[0].mxu0
        %v761 = vadd.f32 %v464, %v760
        %v762 = vpop.f32.mrb[0].mxu0
        %v763 = vpop.f32.mrb[0].mxu0
        %v764 = vadd.f32 %v467, %v763
        %v765 = vpop.f32.mrb[0].mxu0
        %766 = vmatprep.mubr.bf16.mxu0 0
        %767 = vmatmul.mubr.bf16.gmra.mrb[0].mxu0 %v664
        %v768 = vpop.f32.mrb[0].mxu0
        %v769 = vadd.f32 %v472, %v768
        %v770 = vpop.f32.mrb[0].mxu0
        %v771 = vpop.f32.mrb[0].mxu0
        %v772 = vadd.f32 %v475, %v771
        %v773 = vpop.f32.mrb[0].mxu0
        %774 = vmatprep.mubr.bf16.mxu0 0
        %775 = vmatmul.mubr.bf16.gmra.mrb[0].mxu0 %v667
        %v776 = vpop.f32.mrb[0].mxu0
        %v777 = vadd.f32 %v480, %v776
        %v778 = vpop.f32.mrb[0].mxu0
        %v779 = vpop.f32.mrb[0].mxu0
        %v780 = vadd.f32 %v483, %v779
        %v781 = vpop.f32.mrb[0].mxu0
        %782 = vmatprep.mubr.bf16.mxu0 0
        %783 = vmatmul.mubr.bf16.gmra.mrb[0].mxu0 %v670
        %v784 = vpop.f32.mrb[0].mxu0
        %v785 = vadd.f32 %v488, %v784
        %v786 = vpop.f32.mrb[0].mxu0
        %v787 = vpop.f32.mrb[0].mxu0
        %v788 = vadd.f32 %v491, %v787
        %v789 = vpop.f32.mrb[0].mxu0
        %790 = vmatprep.mubr.bf16.mxu0 0
        %791 = vmatmul.mubr.bf16.gmra.mrb[0].mxu0 %v673
        %v792 = vpop.f32.mrb[0].mxu0
        %v793 = vadd.f32 %v496, %v792
        %v794 = vpop.f32.mrb[0].mxu0
        %v795 = vpop.f32.mrb[0].mxu0
        %v796 = vadd.f32 %v499, %v795
        %v797 = vpop.f32.mrb[0].mxu0
        %798 = vmatprep.mubr.bf16.mxu0 0
        %799 = vmatmul.mubr.bf16.gmra.mrb[0].mxu0 %v676
        %v800 = vpop.f32.mrb[0].mxu0
        %v801 = vadd.f32 %v504, %v800
        %v802 = vpop.f32.mrb[0].mxu0
        %v803 = vpop.f32.mrb[0].mxu0
        %v804 = vadd.f32 %v507, %v803
        %v805 = vpop.f32.mrb[0].mxu0
        %806 = vmatprep.mubr.bf16.mxu0 0
        %807 = vmatmul.mubr.bf16.gmra.mrb[0].mxu0 %v679
        %v808 = vpop.f32.mrb[0].mxu0
        %v809 = vadd.f32 %v512, %v808
        %v810 = vpop.f32.mrb[0].mxu0
        %v811 = vpop.f32.mrb[0].mxu0
        %v812 = vadd.f32 %v515, %v811
        %v813 = vpop.f32.mrb[0].mxu0
        %814 = vmatprep.mubr.bf16.mxu0 0
        %815 = vmatmul.mubr.bf16.gmra.mrb[0].mxu0 %v682
        %v816 = vpop.f32.mrb[0].mxu0
        %v817 = vadd.f32 %v520, %v816
        %v818 = vpop.f32.mrb[0].mxu0
        %v819 = vpop.f32.mrb[0].mxu0
        %v820 = vadd.f32 %v523, %v819
        %v821 = vpop.f32.mrb[0].mxu0
        %822 = vmatprep.mubr.bf16.mxu0 0
        %823 = vmatmul.mubr.bf16.gmra.mrb[0].mxu0 %v685
        %v824 = vpop.f32.mrb[0].mxu0
        %v825 = vadd.f32 %v528, %v824
        %v826 = vpop.f32.mrb[0].mxu0
        %v827 = vpop.f32.mrb[0].mxu0
        %v828 = vadd.f32 %v531, %v827
        %v829 = vpop.f32.mrb[0].mxu0
        %830 = vmatprep.mubr.bf16.mxu0 0
        %831 = vmatmul.mubr.bf16.gmra.mrb[0].mxu0 %v688
        %v832 = vpop.f32.mrb[0].mxu0
        %v833 = vadd.f32 %v536, %v832
        %v834 = vpop.f32.mrb[0].mxu0
        %v835 = vpop.f32.mrb[0].mxu0
        %v836 = vadd.f32 %v539, %v835
        %v837 = vpop.f32.mrb[0].mxu0
        %838 = vmatprep.mubr.bf16.mxu0 0
        %839 = vmatmul.mubr.bf16.gmra.mrb[0].mxu0 %v691
        %v840 = vpop.f32.mrb[0].mxu0
        %v841 = vadd.f32 %v544, %v840
        %v842 = vpop.f32.mrb[0].mxu0
        %v843 = vpop.f32.mrb[0].mxu0
        %v844 = vadd.f32 %v547, %v843
        %v845 = vpop.f32.mrb[0].mxu0
        %846 = vmatprep.mubr.bf16.mxu0 0
        %847 = vmatmul.mubr.bf16.gmra.mrb[0].mxu0 %v694
        %v848 = vpop.f32.mrb[0].mxu0
        %v849 = vadd.f32 %v552, %v848
        %v850 = vpop.f32.mrb[0].mxu0
        %v851 = vpop.f32.mrb[0].mxu0
        %v852 = vadd.f32 %v555, %v851
        %v853 = vpop.f32.mrb[0].mxu0
        %854 = vmatprep.mubr.bf16.mxu0 0
        %855 = vmatmul.mubr.bf16.gmra.mrb[0].mxu0 %v697
        %v856 = vpop.f32.mrb[0].mxu0
        %v857 = vadd.f32 %v560, %v856
        %v858 = vpop.f32.mrb[0].mxu0
        %v859 = vpop.f32.mrb[0].mxu0
        %v860 = vadd.f32 %v563, %v859
        %v861 = vpop.f32.mrb[0].mxu0
        %862 = vdwg.mxu0
        %s863 = sadd.s32 %s185, 2
        %s864 = smul.u32 %s863, 16
        %s865 = sshra.s32 %s864, 3
        %s866 = sand.u32 %s864, 7
        %s867 = smul.addr %s865, 4
        %s868 = scalar_lea.vmem %s182, %s867
        %v869 = vld [vmem:[%s868] sm:$0xf]
        %v870 = vld [vmem:[%s868 + $0x4] sm:$0xf]
        %v871 = vld [vmem:[%s868 + $0x8] sm:$0xf]
        %v872 = vld [vmem:[%s868 + $0xc] sm:$0xf]
        %v873 = vld [vmem:[%s868 + $0x10] sm:$0xf]
        %v874 = vld [vmem:[%s868 + $0x14] sm:$0xf]
        %v875 = vld [vmem:[%s868 + $0x18] sm:$0xf]
        %v876 = vld [vmem:[%s868 + $0x1c] sm:$0xf]
        %v877 = vld [vmem:[%s868 + $0x20] sm:$0xf]
        %v878 = vld [vmem:[%s868 + $0x24] sm:$0xf]
        %v879 = vld [vmem:[%s868 + $0x28] sm:$0xf]
        %v880 = vld [vmem:[%s868 + $0x2c] sm:$0xf]
        %v881 = vld [vmem:[%s868 + $0x30] sm:$0xf]
        %v882 = vld [vmem:[%s868 + $0x34] sm:$0xf]
        %v883 = vld [vmem:[%s868 + $0x38] sm:$0xf]
        %v884 = vld [vmem:[%s868 + $0x3c] sm:$0xf]
        %v885 = vld [vmem:[%s868 + $0x40] sm:$0xf]
        %v886 = vld [vmem:[%s868 + $0x44] sm:$0xf]
        %v887 = vld [vmem:[%s868 + $0x48] sm:$0xf]
        %v888 = vld [vmem:[%s868 + $0x4c] sm:$0xf]
        %v889 = vld [vmem:[%s868 + $0x50] sm:$0xf]
        %v890 = vld [vmem:[%s868 + $0x54] sm:$0xf]
        %v891 = vld [vmem:[%s868 + $0x58] sm:$0xf]
        %v892 = vld [vmem:[%s868 + $0x5c] sm:$0xf]
        %v893 = vld [vmem:[%s868 + $0x60] sm:$0xf]
        %v894 = vld [vmem:[%s868 + $0x64] sm:$0xf]
        %v895 = vld [vmem:[%s868 + $0x68] sm:$0xf]
        %v896 = vld [vmem:[%s868 + $0x6c] sm:$0xf]
        %v897 = vld [vmem:[%s868 + $0x70] sm:$0xf]
        %v898 = vld [vmem:[%s868 + $0x74] sm:$0xf]
        %v899 = vld [vmem:[%s868 + $0x78] sm:$0xf]
        %v900 = vld [vmem:[%s868 + $0x7c] sm:$0xf]
        %s901 = scalar_lea.vmem %s1, 16
        %v902 = vld [vmem:[%s901] sm:$0xf]
        %v903 = vld [vmem:[%s901 + $0x4] sm:$0x3]
        %v936 = vunpack.c.l.b16 %v869
        %v937 = vunpack.c.l.b16 %v870
        %v938 = vunpack.c.l.b16 %v871
        %v939 = vunpack.c.l.b16 %v872
        %v940 = vunpack.c.l.b16 %v873
        %v941 = vunpack.c.l.b16 %v874
        %v942 = vunpack.c.l.b16 %v875
        %v943 = vunpack.c.l.b16 %v876
        %v944 = vunpack.c.l.b16 %v877
        %v945 = vunpack.c.l.b16 %v878
        %v946 = vunpack.c.l.b16 %v879
        %v947 = vunpack.c.l.b16 %v880
        %v948 = vunpack.c.l.b16 %v881
        %v949 = vunpack.c.l.b16 %v882
        %v950 = vunpack.c.l.b16 %v883
        %v951 = vunpack.c.l.b16 %v884
        %v952 = vunpack.c.l.b16 %v885
        %v953 = vunpack.c.l.b16 %v886
        %v954 = vunpack.c.l.b16 %v887
        %v955 = vunpack.c.l.b16 %v888
        %v956 = vunpack.c.l.b16 %v889
        %v957 = vunpack.c.l.b16 %v890
        %v958 = vunpack.c.l.b16 %v891
        %v959 = vunpack.c.l.b16 %v892
        %v960 = vunpack.c.l.b16 %v893
        %v961 = vunpack.c.l.b16 %v894
        %v962 = vunpack.c.l.b16 %v895
        %v963 = vunpack.c.l.b16 %v896
        %v964 = vunpack.c.l.b16 %v897
        %v965 = vunpack.c.l.b16 %v898
        %v966 = vunpack.c.l.b16 %v899
        %v967 = vunpack.c.l.b16 %v900
        %v968 = vpack.c.b16 %v937, %v936
        %v969 = vpack.c.b16 %v939, %v938
        %v970 = vpack.c.b16 %v941, %v940
        %v971 = vpack.c.b16 %v943, %v942
        %v972 = vpack.c.b16 %v945, %v944
        %v973 = vpack.c.b16 %v947, %v946
        %v974 = vpack.c.b16 %v949, %v948
        %v975 = vpack.c.b16 %v951, %v950
        %v976 = vpack.c.b16 %v953, %v952
        %v977 = vpack.c.b16 %v955, %v954
        %v978 = vpack.c.b16 %v957, %v956
        %v979 = vpack.c.b16 %v959, %v958
        %v980 = vpack.c.b16 %v961, %v960
        %v981 = vpack.c.b16 %v963, %v962
        %v982 = vpack.c.b16 %v965, %v964
        %v983 = vpack.c.b16 %v967, %v966
        %v986 = vunpack.c.l.b16 %v902
        %v987 = vunpack.c.l.b16 %v903
        %v988 = vpack.c.b16 %v987, %v986
        %v990 = vsel %vm352, %v968, 0
        %v993 = vsel %vm352, %v969, 0
        %v996 = vsel %vm352, %v970, 0
        %v999 = vsel %vm352, %v971, 0
        %v1002 = vsel %vm352, %v972, 0
        %v1005 = vsel %vm352, %v973, 0
        %v1008 = vsel %vm352, %v974, 0
        %v1011 = vsel %vm352, %v975, 0
        %v1014 = vsel %vm352, %v976, 0
        %v1017 = vsel %vm352, %v977, 0
        %v1020 = vsel %vm352, %v978, 0
        %v1023 = vsel %vm352, %v979, 0
        %v1026 = vsel %vm352, %v980, 0
        %v1029 = vsel %vm352, %v981, 0
        %v1032 = vsel %vm352, %v982, 0
        %v1035 = vsel %vm352, %v983, 0
        %v1038 = vsel %vm401, %v988, 0
        %1040 = vmatprep.subr.bf16.mxu0 0
        %1041 = vmatpush1.bf16.msra.mxu0 %v1038
        %1042 = vmatprep.subr.bf16.mxu0 0
        %1043 = vmatpush1.bf16.msra.mxu0 0
        %1044 = vmatprep.subr.bf16.mxu0 0
        %1045 = vmatpush1.bf16.msra.mxu0 0
        %1046 = vmatprep.subr.bf16.mxu0 0
        %1047 = vmatpush1.bf16.msra.mxu0 0
        %1048 = vmatprep.subr.bf16.mxu0 0
        %1049 = vmatpush1.bf16.msra.mxu0 0
        %1050 = vmatprep.subr.bf16.mxu0 0
        %1051 = vmatpush1.bf16.msra.mxu0 0
        %1052 = vmatprep.subr.bf16.mxu0 0
        %1053 = vmatpush1.bf16.msra.mxu0 0
        %1054 = vmatprep.subr.bf16.mxu0 0
        %1055 = vmatpush1.bf16.msra.mxu0 0
        %1056 = vmatprep.subr.bf16.mxu0 0
        %1057 = vmatpush1.bf16.msra.mxu0 0
        %1058 = vmatprep.subr.bf16.mxu0 0
        %1059 = vmatpush1.bf16.msra.mxu0 0
        %1060 = vmatprep.subr.bf16.mxu0 0
        %1061 = vmatpush1.bf16.msra.mxu0 0
        %1062 = vmatprep.subr.bf16.mxu0 0
        %1063 = vmatpush1.bf16.msra.mxu0 0
        %1064 = vmatprep.subr.bf16.mxu0 0
        %1065 = vmatpush1.bf16.msra.mxu0 0
        %1066 = vmatprep.subr.bf16.mxu0 0
        %1067 = vmatpush1.bf16.msra.mxu0 0
        %1068 = vmatprep.subr.bf16.mxu0 0
        %1069 = vmatpush1.bf16.msra.mxu0 0
        %1070 = vmatprep.subr.bf16.mxu0 0
        %1071 = vmatpush1.bf16.msra.mxu0 0
        %1072 = vmatprep.mubr.bf16.mxu0 0
        %1073 = vmatmul.mubr.bf16.gmra.mrb[0].mxu0 %v990
        %v1074 = vpop.f32.mrb[0].mxu0
        %v1075 = vadd.f32 0.0, %v1074
        %v1076 = vpop.f32.mrb[0].mxu0
        %v1077 = vpop.f32.mrb[0].mxu0
        %v1078 = vadd.f32 0.0, %v1077
        %v1079 = vpop.f32.mrb[0].mxu0
        %1080 = vmatprep.mubr.bf16.mxu0 0
        %1081 = vmatmul.mubr.bf16.gmra.mrb[0].mxu0 %v993
        %v1082 = vpop.f32.mrb[0].mxu0
        %v1083 = vadd.f32 0.0, %v1082
        %v1084 = vpop.f32.mrb[0].mxu0
        %v1085 = vpop.f32.mrb[0].mxu0
        %v1086 = vadd.f32 0.0, %v1085
        %v1087 = vpop.f32.mrb[0].mxu0
        %1088 = vmatprep.mubr.bf16.mxu0 0
        %1089 = vmatmul.mubr.bf16.gmra.mrb[0].mxu0 %v996
        %v1090 = vpop.f32.mrb[0].mxu0
        %v1091 = vadd.f32 0.0, %v1090
        %v1092 = vpop.f32.mrb[0].mxu0
        %v1093 = vpop.f32.mrb[0].mxu0
        %v1094 = vadd.f32 0.0, %v1093
        %v1095 = vpop.f32.mrb[0].mxu0
        %1096 = vmatprep.mubr.bf16.mxu0 0
        %1097 = vmatmul.mubr.bf16.gmra.mrb[0].mxu0 %v999
        %v1098 = vpop.f32.mrb[0].mxu0
        %v1099 = vadd.f32 0.0, %v1098
        %v1100 = vpop.f32.mrb[0].mxu0
        %v1101 = vpop.f32.mrb[0].mxu0
        %v1102 = vadd.f32 0.0, %v1101
        %v1103 = vpop.f32.mrb[0].mxu0
        %1104 = vmatprep.mubr.bf16.mxu0 0
        %1105 = vmatmul.mubr.bf16.gmra.mrb[0].mxu0 %v1002
        %v1106 = vpop.f32.mrb[0].mxu0
        %v1107 = vadd.f32 0.0, %v1106
        %v1108 = vpop.f32.mrb[0].mxu0
        %v1109 = vpop.f32.mrb[0].mxu0
        %v1110 = vadd.f32 0.0, %v1109
        %v1111 = vpop.f32.mrb[0].mxu0
        %1112 = vmatprep.mubr.bf16.mxu0 0
        %1113 = vmatmul.mubr.bf16.gmra.mrb[0].mxu0 %v1005
        %v1114 = vpop.f32.mrb[0].mxu0
        %v1115 = vadd.f32 0.0, %v1114
        %v1116 = vpop.f32.mrb[0].mxu0
        %v1117 = vpop.f32.mrb[0].mxu0
        %v1118 = vadd.f32 0.0, %v1117
        %v1119 = vpop.f32.mrb[0].mxu0
        %1120 = vmatprep.mubr.bf16.mxu0 0
        %1121 = vmatmul.mubr.bf16.gmra.mrb[0].mxu0 %v1008
        %v1122 = vpop.f32.mrb[0].mxu0
        %v1123 = vadd.f32 0.0, %v1122
        %v1124 = vpop.f32.mrb[0].mxu0
        %v1125 = vpop.f32.mrb[0].mxu0
        %v1126 = vadd.f32 0.0, %v1125
        %v1127 = vpop.f32.mrb[0].mxu0
        %1128 = vmatprep.mubr.bf16.mxu0 0
        %1129 = vmatmul.mubr.bf16.gmra.mrb[0].mxu0 %v1011
        %v1130 = vpop.f32.mrb[0].mxu0
        %v1131 = vadd.f32 0.0, %v1130
        %v1132 = vpop.f32.mrb[0].mxu0
        %v1133 = vpop.f32.mrb[0].mxu0
        %v1134 = vadd.f32 0.0, %v1133
        %v1135 = vpop.f32.mrb[0].mxu0
        %1136 = vmatprep.mubr.bf16.mxu0 0
        %1137 = vmatmul.mubr.bf16.gmra.mrb[0].mxu0 %v1014
        %v1138 = vpop.f32.mrb[0].mxu0
        %v1139 = vadd.f32 0.0, %v1138
        %v1140 = vpop.f32.mrb[0].mxu0
        %v1141 = vpop.f32.mrb[0].mxu0
        %v1142 = vadd.f32 0.0, %v1141
        %v1143 = vpop.f32.mrb[0].mxu0
        %1144 = vmatprep.mubr.bf16.mxu0 0
        %1145 = vmatmul.mubr.bf16.gmra.mrb[0].mxu0 %v1017
        %v1146 = vpop.f32.mrb[0].mxu0
        %v1147 = vadd.f32 0.0, %v1146
        %v1148 = vpop.f32.mrb[0].mxu0
        %v1149 = vpop.f32.mrb[0].mxu0
        %v1150 = vadd.f32 0.0, %v1149
        %v1151 = vpop.f32.mrb[0].mxu0
        %1152 = vmatprep.mubr.bf16.mxu0 0
        %1153 = vmatmul.mubr.bf16.gmra.mrb[0].mxu0 %v1020
        %v1154 = vpop.f32.mrb[0].mxu0
        %v1155 = vadd.f32 0.0, %v1154
        %v1156 = vpop.f32.mrb[0].mxu0
        %v1157 = vpop.f32.mrb[0].mxu0
        %v1158 = vadd.f32 0.0, %v1157
        %v1159 = vpop.f32.mrb[0].mxu0
        %1160 = vmatprep.mubr.bf16.mxu0 0
        %1161 = vmatmul.mubr.bf16.gmra.mrb[0].mxu0 %v1023
        %v1162 = vpop.f32.mrb[0].mxu0
        %v1163 = vadd.f32 0.0, %v1162
        %v1164 = vpop.f32.mrb[0].mxu0
        %v1165 = vpop.f32.mrb[0].mxu0
        %v1166 = vadd.f32 0.0, %v1165
        %v1167 = vpop.f32.mrb[0].mxu0
        %1168 = vmatprep.mubr.bf16.mxu0 0
        %1169 = vmatmul.mubr.bf16.gmra.mrb[0].mxu0 %v1026
        %v1170 = vpop.f32.mrb[0].mxu0
        %v1171 = vadd.f32 0.0, %v1170
        %v1172 = vpop.f32.mrb[0].mxu0
        %v1173 = vpop.f32.mrb[0].mxu0
        %v1174 = vadd.f32 0.0, %v1173
        %v1175 = vpop.f32.mrb[0].mxu0
        %1176 = vmatprep.mubr.bf16.mxu0 0
        %1177 = vmatmul.mubr.bf16.gmra.mrb[0].mxu0 %v1029
        %v1178 = vpop.f32.mrb[0].mxu0
        %v1179 = vadd.f32 0.0, %v1178
        %v1180 = vpop.f32.mrb[0].mxu0
        %v1181 = vpop.f32.mrb[0].mxu0
        %v1182 = vadd.f32 0.0, %v1181
        %v1183 = vpop.f32.mrb[0].mxu0
        %1184 = vmatprep.mubr.bf16.mxu0 0
        %1185 = vmatmul.mubr.bf16.gmra.mrb[0].mxu0 %v1032
        %v1186 = vpop.f32.mrb[0].mxu0
        %v1187 = vadd.f32 0.0, %v1186
        %v1188 = vpop.f32.mrb[0].mxu0
        %v1189 = vpop.f32.mrb[0].mxu0
        %v1190 = vadd.f32 0.0, %v1189
        %v1191 = vpop.f32.mrb[0].mxu0
        %1192 = vmatprep.mubr.bf16.mxu0 0
        %1193 = vmatmul.mubr.bf16.gmra.mrb[0].mxu0 %v1035
        %v1194 = vpop.f32.mrb[0].mxu0
        %v1195 = vadd.f32 0.0, %v1194
        %v1196 = vpop.f32.mrb[0].mxu0
        %v1197 = vpop.f32.mrb[0].mxu0
        %v1198 = vadd.f32 0.0, %v1197
        %v1199 = vpop.f32.mrb[0].mxu0
        %1200 = vdwg.mxu0
        %v1201 = vadd.f32 %v737, %v1075
        %v1202 = vadd.f32 %v740, %v1078
        %v1203 = vadd.f32 %v745, %v1083
        %v1204 = vadd.f32 %v748, %v1086
        %v1205 = vadd.f32 %v753, %v1091
        %v1206 = vadd.f32 %v756, %v1094
        %v1207 = vadd.f32 %v761, %v1099
        %v1208 = vadd.f32 %v764, %v1102
        %v1209 = vadd.f32 %v769, %v1107
        %v1210 = vadd.f32 %v772, %v1110
        %v1211 = vadd.f32 %v777, %v1115
        %v1212 = vadd.f32 %v780, %v1118
        %v1213 = vadd.f32 %v785, %v1123
        %v1214 = vadd.f32 %v788, %v1126
        %v1215 = vadd.f32 %v793, %v1131
        %v1216 = vadd.f32 %v796, %v1134
        %v1217 = vadd.f32 %v801, %v1139
        %v1218 = vadd.f32 %v804, %v1142
        %v1219 = vadd.f32 %v809, %v1147
        %v1220 = vadd.f32 %v812, %v1150
        %v1221 = vadd.f32 %v817, %v1155
        %v1222 = vadd.f32 %v820, %v1158
        %v1223 = vadd.f32 %v825, %v1163
        %v1224 = vadd.f32 %v828, %v1166
        %v1225 = vadd.f32 %v833, %v1171
        %v1226 = vadd.f32 %v836, %v1174
        %v1227 = vadd.f32 %v841, %v1179
        %v1228 = vadd.f32 %v844, %v1182
        %v1229 = vadd.f32 %v849, %v1187
        %v1230 = vadd.f32 %v852, %v1190
        %v1231 = vadd.f32 %v857, %v1195
        %v1232 = vadd.f32 %v860, %v1198
        %v1234 = vlaneseq
        %v1235 = vshrl.u32 %v1234, 7
        %v1236 = vsub.s32 0, %v1235
        %v1237 = vrot.slane %v186, %v1236
        %v1239 = vadd.f32 %v1201, %v1237
        %v1240 = vadd.f32 %v1202, %v1237
        %v1241 = vadd.f32 %v1203, %v1237
        %v1242 = vadd.f32 %v1204, %v1237
        %v1243 = vadd.f32 %v1205, %v1237
        %v1244 = vadd.f32 %v1206, %v1237
        %v1245 = vadd.f32 %v1207, %v1237
        %v1246 = vadd.f32 %v1208, %v1237
        %v1247 = vadd.f32 %v1209, %v1237
        %v1248 = vadd.f32 %v1210, %v1237
        %v1249 = vadd.f32 %v1211, %v1237
        %v1250 = vadd.f32 %v1212, %v1237
        %v1251 = vadd.f32 %v1213, %v1237
        %v1252 = vadd.f32 %v1214, %v1237
        %v1253 = vadd.f32 %v1215, %v1237
        %v1254 = vadd.f32 %v1216, %v1237
        %v1255 = vadd.f32 %v1217, %v1237
        %v1256 = vadd.f32 %v1218, %v1237
        %v1257 = vadd.f32 %v1219, %v1237
        %v1258 = vadd.f32 %v1220, %v1237
        %v1259 = vadd.f32 %v1221, %v1237
        %v1260 = vadd.f32 %v1222, %v1237
        %v1261 = vadd.f32 %v1223, %v1237
        %v1262 = vadd.f32 %v1224, %v1237
        %v1263 = vadd.f32 %v1225, %v1237
        %v1264 = vadd.f32 %v1226, %v1237
        %v1265 = vadd.f32 %v1227, %v1237
        %v1266 = vadd.f32 %v1228, %v1237
        %v1267 = vadd.f32 %v1229, %v1237
        %v1268 = vadd.f32 %v1230, %v1237
        %v1269 = vadd.f32 %v1231, %v1237
        %v1270 = vadd.f32 %v1232, %v1237
        %v1271 = vmax.f32 %v1239, 0.0
        %v1272 = vmax.f32 %v1240, 0.0
        %v1273 = vmax.f32 %v1241, 0.0
        %v1274 = vmax.f32 %v1242, 0.0
        %v1275 = vmax.f32 %v1243, 0.0
        %v1276 = vmax.f32 %v1244, 0.0
        %v1277 = vmax.f32 %v1245, 0.0
        %v1278 = vmax.f32 %v1246, 0.0
        %v1279 = vmax.f32 %v1247, 0.0
        %v1280 = vmax.f32 %v1248, 0.0
        %v1281 = vmax.f32 %v1249, 0.0
        %v1282 = vmax.f32 %v1250, 0.0
        %v1283 = vmax.f32 %v1251, 0.0
        %v1284 = vmax.f32 %v1252, 0.0
        %v1285 = vmax.f32 %v1253, 0.0
        %v1286 = vmax.f32 %v1254, 0.0
        %v1287 = vmax.f32 %v1255, 0.0
        %v1288 = vmax.f32 %v1256, 0.0
        %v1289 = vmax.f32 %v1257, 0.0
        %v1290 = vmax.f32 %v1258, 0.0
        %v1291 = vmax.f32 %v1259, 0.0
        %v1292 = vmax.f32 %v1260, 0.0
        %v1293 = vmax.f32 %v1261, 0.0
        %v1294 = vmax.f32 %v1262, 0.0
        %v1295 = vmax.f32 %v1263, 0.0
        %v1296 = vmax.f32 %v1264, 0.0
        %v1297 = vmax.f32 %v1265, 0.0
        %v1298 = vmax.f32 %v1266, 0.0
        %v1299 = vmax.f32 %v1267, 0.0
        %v1300 = vmax.f32 %v1268, 0.0
        %v1301 = vmax.f32 %v1269, 0.0
        %v1302 = vmax.f32 %v1270, 0.0
        %1303 = vst [vmem:[%s177] sm:$0xff] %v1271
        %1304 = vst [vmem:[%s177 + $0x8] sm:$0xff] %v1272
        %1305 = vst [vmem:[%s177 + $0x10] sm:$0xff] %v1273
        %1306 = vst [vmem:[%s177 + $0x18] sm:$0xff] %v1274
        %1307 = vst [vmem:[%s177 + $0x20] sm:$0xff] %v1275
        %1308 = vst [vmem:[%s177 + $0x28] sm:$0xff] %v1276
        %1309 = vst [vmem:[%s177 + $0x30] sm:$0xff] %v1277
        %1310 = vst [vmem:[%s177 + $0x38] sm:$0xff] %v1278
        %1311 = vst [vmem:[%s177 + $0x40] sm:$0xff] %v1279
        %1312 = vst [vmem:[%s177 + $0x48] sm:$0xff] %v1280
        %1313 = vst [vmem:[%s177 + $0x50] sm:$0xff] %v1281
        %1314 = vst [vmem:[%s177 + $0x58] sm:$0xff] %v1282
        %1315 = vst [vmem:[%s177 + $0x60] sm:$0xff] %v1283
        %1316 = vst [vmem:[%s177 + $0x68] sm:$0xff] %v1284
        %1317 = vst [vmem:[%s177 + $0x70] sm:$0xff] %v1285
        %1318 = vst [vmem:[%s177 + $0x78] sm:$0xff] %v1286
        %1319 = vst [vmem:[%s177 + $0x80] sm:$0xff] %v1287
        %1320 = vst [vmem:[%s177 + $0x88] sm:$0xff] %v1288
        %1321 = vst [vmem:[%s177 + $0x90] sm:$0xff] %v1289
        %1322 = vst [vmem:[%s177 + $0x98] sm:$0xff] %v1290
        %1323 = vst [vmem:[%s177 + $0xa0] sm:$0xff] %v1291
        %1324 = vst [vmem:[%s177 + $0xa8] sm:$0xff] %v1292
        %1325 = vst [vmem:[%s177 + $0xb0] sm:$0xff] %v1293
        %1326 = vst [vmem:[%s177 + $0xb8] sm:$0xff] %v1294
        %1327 = vst [vmem:[%s177 + $0xc0] sm:$0xff] %v1295
        %1328 = vst [vmem:[%s177 + $0xc8] sm:$0xff] %v1296
        %1329 = vst [vmem:[%s177 + $0xd0] sm:$0xff] %v1297
        %1330 = vst [vmem:[%s177 + $0xd8] sm:$0xff] %v1298
        %1331 = vst [vmem:[%s177 + $0xe0] sm:$0xff] %v1299
        %1332 = vst [vmem:[%s177 + $0xe8] sm:$0xff] %v1300
        %1333 = vst [vmem:[%s177 + $0xf0] sm:$0xff] %v1301
        %1334 = vst [vmem:[%s177 + $0xf8] sm:$0xff] %v1302
        %s1335 = sand.u32 %s107, 1
        %s1336 = scalar_lea.sflag [#allocation3], %s1335
        %s1337 = sand.u32 %s107, 1
        %s1338 = smul.addr %s1337, 256
        %s1339 = scalar_lea.vmem [#allocation2], %s1338
        // Predicated region
        $region33: #{tpu_custom_call.1} parent=31 // pred_check
          %p1340 = pneg %p117
        $region34: #{tpu_custom_call.1} parent=31 // pred_check_branch
          %1342 = sbr.rel (%p1340) target = $region36
        $region35: #{tpu_custom_call.1} parent=31 // pred_region
          %s1343 = smul.u32 32, %s22
          %s1345 = ssub.s32 4096, 4096
          %1346 = vsyncadd %s1336, %s1345
          %s1347 = smul.addr %s21, 32
          %s1348 = sadd.s32 %s1343, %s1347
          %s1349 = smul.addr %s1348, 128
          %s1350 = scalar_lea.hbm %s3, %s1349
          %s1351 = sshll.u32 %s1339, 4
          %s1352 = int_to_ptr.vmem [resolvable:$true] %s1351
          %1357 = dma.vmem_to_hbm [thread:$0]  %s1352, 4096, %s1350, %s1336, 128, 128, 8
        $region36: #{tpu_custom_call.1} parent=31 // pred_fallthru
          _
      $region32: #{tpu_custom_call.1} parent=5 // pred_fallthru
        _
      %p1358 = scmp.le.s32.totalorder 2, %s12
      // Predicated region
      $region37: #{tpu_custom_call.1} parent=5 // pred_check
        %p1359 = pneg %p1358
      $region38: #{tpu_custom_call.1} parent=5 // pred_check_branch
        %1361 = sbr.rel (%p1359) target = $region40
      $region39: #{tpu_custom_call.1} parent=5 // pred_region
        %s1362 = ssub.s32 %s12, 2
        // Predicated region
        $region41: #{tpu_custom_call.1} parent=39 // pred_check
          %p1363 = pneg %p123
        $region42: #{tpu_custom_call.1} parent=39 // pred_check_branch
          %1365 = sbr.rel (%p1363) target = $region44
        $region43: #{tpu_custom_call.1} parent=39 // pred_region
          %s1366 = sand.u32 %s108, 1
          %s1367 = scalar_lea.sflag [#allocation3], %s1366
          %s1368 = sand.u32 %s108, 1
          %s1369 = smul.addr %s1368, 256
          %s1370 = scalar_lea.vmem [#allocation2], %s1369
          %1371 = dma.done %s1367, 4096
        $region44: #{tpu_custom_call.1} parent=39 // pred_fallthru
          _
      $region40: #{tpu_custom_call.1} parent=5 // pred_fallthru
        _
    $region6: #{tpu_custom_call.1} parent=1 // loop_footer
      %s16 = sadd.s32 1, %s12
    $region7: #{tpu_custom_call.1} parent=1 // loop_footer_branch
      %11 = sbr.rel target = $region3
    $region8: #{tpu_custom_call.1} parent=1 // loop_exit
      _
    %1372 = vsyncpa [#allocation3], 1
    %s1373 = scalar_lea.sflag [#allocation3], 1
    %1374 = vsyncpa %s1373, 1

</llo_original>
